<compile_context>
chip_gen: v5e
topology: v5e:2x2
jax: 0.10.0
libtpu: 0.0.40
codegen_flags: <defaults>
</compile_context>

<pallas_src>
import functools

import numpy as np
import jax
import jax.numpy as jnp
from jax import lax
from jax.experimental import pallas as pl
from jax.experimental.pallas import tpu as pltpu

_LANE = 128
_SUBLANE = 8


def _round_up(x: int, m: int) -> int:
    return -(-x // m) * m


def _adaptive_pool_matrix(in_size: int, out_size: int) -> np.ndarray:
    """Exact AdaptiveAvgPool1d as a dense [out_size, in_size] averaging matrix."""
    m = np.zeros((out_size, in_size), dtype=np.float32)
    for i in range(out_size):
        start = (i * in_size) // out_size
        end = -(-((i + 1) * in_size) // out_size)  # ceil division
        m[i, start:end] = 1.0 / float(end - start)
    return m


@functools.lru_cache(maxsize=1)
def _chip_profile():
    """Returns (block_vmem_budget, vmem_limit_bytes, multi_core) per generation."""
    cap = None
    try:
        cap = int(pltpu.get_tpu_info().vmem_capacity_bytes)
    except Exception:
        cap = None
    if cap is not None and cap >= 112 * 1024 * 1024:
        # v5e / v6e: 128 MiB VMEM, single TensorCore per chip.
        return 72 * 1024 * 1024, 100 * 1024 * 1024, False
    # v7x-like (64 MiB per TC, 2 TCs) or unknown: stay conservative.
    return 30 * 1024 * 1024, 44 * 1024 * 1024, True


def _vmem_plan(h, w, s, in_itemsize, out_itemsize):
    """Lane/sublane-padded VMEM usage: per-plane (scales with BN) and fixed."""
    w_l, s_l, h_l = _round_up(w, _LANE), _round_up(s, _LANE), _round_up(h, _LANE)
    w_r, s_r, h_r = (_round_up(w, _SUBLANE), _round_up(s, _SUBLANE),
                     _round_up(h, _SUBLANE))
    per_plane = (
        2 * h_r * w_l * in_itemsize     # double-buffered input block
        + 2 * s_r * s_l * out_itemsize  # double-buffered output block (real dtype)
    )
    fixed = (
        2 * (w_r * s_l + s_r * h_l) * 4  # double-buffered pwt [W,S] + ph [S,H] (f32)
        + h_r * w_l * 4                  # one plane of x as a live value
        + h_r * s_l * 4                  # t_b intermediate (f32)
        + 2 * s_r * s_l * 4              # o_b value + cast copy
        + 2 * (1 << 20)                  # compiler scratch slack
    )
    return per_plane, fixed


def _divisors(n: int):
    out = set()
    d = 1
    while d * d <= n:
        if n % d == 0:
            out.add(d)
            out.add(n // d)
        d += 1
    return sorted(out)


def _pick_block_planes(n, per_plane, fixed, budget, multi_core,
                       max_block_planes=None):
    """Planes per grid step: a divisor of N (no padding, no ragged blocks)."""
    bn_cap = int(max(1, (budget - fixed) // max(1, per_plane)))
    if max_block_planes is not None:
        bn_cap = min(bn_cap, int(max_block_planes))
    bn_cap = max(1, min(bn_cap, n))
    cands = [d for d in _divisors(n) if d <= bn_cap]  # always contains 1
    if not multi_core or n == 1:
        return max(cands)
    # Dual-TensorCore chips: prefer an even step count (>= 4 when there is
    # enough work) so both cores get balanced, double-buffered work.
    want = 4 if n >= 4 * _SUBLANE else 2

    def score(d):
        steps = n // d
        return (steps >= want and steps % 2 == 0, steps >= want, d)

    return max(cands, key=score)


def _pool_kernel(x_ref, pwt_ref, ph_ref, o_ref, *, bn):
    # x_ref:   (bn, H, W)  block of bn independent image planes
    # pwt_ref: (W, S)      column (W) pooling matrix, pre-transposed (constant)
    # ph_ref:  (S, H)      row (H) pooling matrix (constant)
    # o_ref:   (bn, S, S)
    pwt = pwt_ref[...]
    ph = ph_ref[...]

    def body(b, carry):
        xb = x_ref[b]                                                 # [H, W]
        t = jnp.dot(xb, pwt, preferred_element_type=jnp.float32)      # [H, S] MXU
        ob = jnp.dot(ph, t, preferred_element_type=jnp.float32)       # [S, S] MXU
        o_ref[b] = ob.astype(o_ref.dtype)
        return carry

    # fori_loop bounds the live ranges of the per-plane intermediates so VMEM is
    # spent on larger input blocks, not on bn copies of ph / t.
    lax.fori_loop(0, bn, body, 0, unroll=bn <= 8)


def _adaptive_avg_pool_pallas(x, *, output_size, max_block_planes=None):
    b, c, h, w = x.shape
    s = int(output_size)
    n = b * c

    # Exact AdaptiveAvgPool2d factorized as  out = Ph @ X @ Pw^T  per plane.
    ph = jnp.asarray(_adaptive_pool_matrix(h, s))                            # [S, H]
    pwt = jnp.asarray(np.ascontiguousarray(_adaptive_pool_matrix(w, s).T))   # [W, S]

    budget, vmem_limit, multi_core = _chip_profile()
    itemsize = x.dtype.itemsize
    per_plane, fixed = _vmem_plan(h, w, s, itemsize, itemsize)
    bn = _pick_block_planes(n, per_plane, fixed, budget, multi_core,
                            max_block_planes)

    x3 = x.reshape(n, h, w)       # free metadata reshape; no HBM copy, no pad
    grid = (n // bn,)             # bn always divides n exactly

    flops = 2 * n * (h * w * s + h * s * s)
    bytes_accessed = (n * (h * w * itemsize + s * s * itemsize)
                      + (w * s + s * h) * 4)

    out = pl.pallas_call(
        functools.partial(_pool_kernel, bn=bn),
        out_shape=jax.ShapeDtypeStruct((n, s, s), x.dtype),
        grid_spec=pltpu.PrefetchScalarGridSpec(
            num_scalar_prefetch=0,
            grid=grid,
            in_specs=[
                pl.BlockSpec((bn, h, w), lambda i: (i, 0, 0)),
                pl.BlockSpec((w, s), lambda i: (0, 0)),   # VMEM-resident constant
                pl.BlockSpec((s, h), lambda i: (0, 0)),   # VMEM-resident constant
            ],
            out_specs=pl.BlockSpec((bn, s, s), lambda i: (i, 0, 0)),
        ),
        compiler_params=pltpu.CompilerParams(
            dimension_semantics=("parallel",),
            vmem_limit_bytes=vmem_limit,
        ),
        cost_estimate=pl.CostEstimate(
            flops=flops, transcendentals=0, bytes_accessed=bytes_accessed),
    )(x3, pwt, ph)

    # Output traffic (S^2 per plane) is tiny vs the H*W read; a lane-dense
    # (bn, S*S) output layout is only worth it if vst ever binds for small S.
    return out.reshape(b, c, s, s)


class ImageAugmentations:
    """JAX/Pallas equivalent of the PyTorch ImageAugmentations module.

    The reference forward returns immediately after AdaptiveAvgPool2d, so the
    effective computation is  out = AdaptiveAvgPool2d((S, S))(input).
    """

    def __init__(self, output_size: int, augmentations_number: int, p: float = 0.7):
        self.output_size = output_size
        self.augmentations_number = augmentations_number  # unused (dead code in ref)
        self.p = p                                         # unused (dead code in ref)
        self._pool = jax.jit(
            functools.partial(_adaptive_avg_pool_pallas, output_size=output_size))

    def __call__(self, x: jnp.ndarray) -> jnp.ndarray:
        # x: [B, C, H, W] (NCHW)  ->  [B, C, S, S]
        return self._pool(x)


if __name__ == "__main__":
    key = jax.random.PRNGKey(0)
    B, C, H, W = 2, 4, 16, 16
    output_size = 8
    augmentations_number = 3

    x = jax.random.normal(key, (B, C, H, W), dtype=jnp.float32)

    module = ImageAugmentations(output_size, augmentations_number, p=0.7)
    out = jax.block_until_ready(module(x))
    assert out.shape == (B, C, output_size, output_size), out.shape

    # Independent reference: H and W are exact multiples of S here, so adaptive
    # average pooling is a plain non-overlapping window mean.
    ref = np.asarray(x).reshape(B, C, output_size, H // output_size,
                                output_size, W // output_size).mean(axis=(3, 5))
    np.testing.assert_allclose(np.asarray(out), ref, rtol=1e-5, atol=1e-5)

    # Exercise the multi-step grid path (several planes-per-step blocks).
    out2 = jax.block_until_ready(
        _adaptive_avg_pool_pallas(x, output_size=output_size, max_block_planes=2))
    np.testing.assert_allclose(np.asarray(out2), ref, rtol=1e-5, atol=1e-5)

    print("KERNEL_OK")
</pallas_src>

<mosaic_0001>
module attributes {stable_mosaic.version = 11 : i64} {
  func.func @_pool_kernel(%arg0: i32, %arg1: memref<4x16x16xf32, #tpu.memory_space<vmem>>, %arg2: memref<16x8xf32, #tpu.memory_space<vmem>>, %arg3: memref<8x16xf32, #tpu.memory_space<vmem>>, %arg4: memref<4x8x8xf32, #tpu.memory_space<vmem>>) attributes {dimension_semantics = [#tpu.dimension_semantics<parallel>], iteration_bounds = array<i64: 2>, scalar_prefetch = 0 : i64, scratch_operands = 0 : i64, tpu.core_type = #tpu.core_type<tc>, window_params = [{transform_indices = @transform_0, window_bounds = array<i64: 4, 16, 16>}, {pipeline_mode = #tpu.pipeline_mode<synchronous>, transform_indices = @transform_1, window_bounds = array<i64: 16, 8>}, {pipeline_mode = #tpu.pipeline_mode<synchronous>, transform_indices = @transform_2, window_bounds = array<i64: 8, 16>}, {transform_indices = @transform_3, window_bounds = array<i64: 4, 8, 8>}]} {
    %c0 = arith.constant 0 : index
    %c0_0 = arith.constant 0 : index
    %0 = vector.load %arg2[%c0, %c0_0] : memref<16x8xf32, #tpu.memory_space<vmem>>, vector<16x8xf32>
    %c0_1 = arith.constant 0 : index
    %c0_2 = arith.constant 0 : index
    %1 = vector.load %arg3[%c0_1, %c0_2] : memref<8x16xf32, #tpu.memory_space<vmem>>, vector<8x16xf32>
    %c0_i32 = arith.constant 0 : i32
    %2 = arith.index_cast %c0_i32 : i32 to index
    %c0_3 = arith.constant 0 : index
    %c0_4 = arith.constant 0 : index
    %3 = vector.load %arg1[%2, %c0_3, %c0_4] : memref<4x16x16xf32, #tpu.memory_space<vmem>>, vector<1x16x16xf32>
    %4 = vector.shape_cast %3 : vector<1x16x16xf32> to vector<16x16xf32>
    %cst = arith.constant dense<0.000000e+00> : vector<16x8xf32>
    %5 = tpu.matmul %4, %0, %cst {dimension_numbers = #tpu.dot_dimension_numbers<[1], [0], [0], [1], [0, 0, 1, 1], [], []>} : vector<16x16xf32>, vector<16x8xf32>, vector<16x8xf32> -> vector<16x8xf32>
    %cst_5 = arith.constant dense<0.000000e+00> : vector<8x8xf32>
    %6 = tpu.matmul %1, %5, %cst_5 {dimension_numbers = #tpu.dot_dimension_numbers<[1], [0], [0], [1], [0, 0, 1, 1], [], []>} : vector<8x16xf32>, vector<16x8xf32>, vector<8x8xf32> -> vector<8x8xf32>
    %7 = arith.index_cast %c0_i32 : i32 to index
    %c0_6 = arith.constant 0 : index
    %c0_7 = arith.constant 0 : index
    %8 = vector.load %arg4[%7, %c0_6, %c0_7] : memref<4x8x8xf32, #tpu.memory_space<vmem>>, vector<1x8x8xf32>
    %9 = vector.shape_cast %8 : vector<1x8x8xf32> to vector<8x8xf32>
    %10 = vector.shape_cast %6 : vector<8x8xf32> to vector<1x8x8xf32>
    tpu.vector_store %arg4[%7, %c0_6, %c0_7], %10 {strides = array<i32>} : memref<4x8x8xf32, #tpu.memory_space<vmem>>, vector<1x8x8xf32>,
    %c1_i32 = arith.constant 1 : i32
    %11 = arith.index_cast %c1_i32 : i32 to index
    %c0_8 = arith.constant 0 : index
    %c0_9 = arith.constant 0 : index
    %12 = vector.load %arg1[%11, %c0_8, %c0_9] : memref<4x16x16xf32, #tpu.memory_space<vmem>>, vector<1x16x16xf32>
    %13 = vector.shape_cast %12 : vector<1x16x16xf32> to vector<16x16xf32>
    %cst_10 = arith.constant dense<0.000000e+00> : vector<16x8xf32>
    %14 = tpu.matmul %13, %0, %cst_10 {dimension_numbers = #tpu.dot_dimension_numbers<[1], [0], [0], [1], [0, 0, 1, 1], [], []>} : vector<16x16xf32>, vector<16x8xf32>, vector<16x8xf32> -> vector<16x8xf32>
    %cst_11 = arith.constant dense<0.000000e+00> : vector<8x8xf32>
    %15 = tpu.matmul %1, %14, %cst_11 {dimension_numbers = #tpu.dot_dimension_numbers<[1], [0], [0], [1], [0, 0, 1, 1], [], []>} : vector<8x16xf32>, vector<16x8xf32>, vector<8x8xf32> -> vector<8x8xf32>
    %16 = arith.index_cast %c1_i32 : i32 to index
    %c0_12 = arith.constant 0 : index
    %c0_13 = arith.constant 0 : index
    %17 = vector.load %arg4[%16, %c0_12, %c0_13] : memref<4x8x8xf32, #tpu.memory_space<vmem>>, vector<1x8x8xf32>
    %18 = vector.shape_cast %17 : vector<1x8x8xf32> to vector<8x8xf32>
    %19 = vector.shape_cast %15 : vector<8x8xf32> to vector<1x8x8xf32>
    tpu.vector_store %arg4[%16, %c0_12, %c0_13], %19 {strides = array<i32>} : memref<4x8x8xf32, #tpu.memory_space<vmem>>, vector<1x8x8xf32>,
    %c2_i32 = arith.constant 2 : i32
    %20 = arith.index_cast %c2_i32 : i32 to index
    %c0_14 = arith.constant 0 : index
    %c0_15 = arith.constant 0 : index
    %21 = vector.load %arg1[%20, %c0_14, %c0_15] : memref<4x16x16xf32, #tpu.memory_space<vmem>>, vector<1x16x16xf32>
    %22 = vector.shape_cast %21 : vector<1x16x16xf32> to vector<16x16xf32>
    %cst_16 = arith.constant dense<0.000000e+00> : vector<16x8xf32>
    %23 = tpu.matmul %22, %0, %cst_16 {dimension_numbers = #tpu.dot_dimension_numbers<[1], [0], [0], [1], [0, 0, 1, 1], [], []>} : vector<16x16xf32>, vector<16x8xf32>, vector<16x8xf32> -> vector<16x8xf32>
    %cst_17 = arith.constant dense<0.000000e+00> : vector<8x8xf32>
    %24 = tpu.matmul %1, %23, %cst_17 {dimension_numbers = #tpu.dot_dimension_numbers<[1], [0], [0], [1], [0, 0, 1, 1], [], []>} : vector<8x16xf32>, vector<16x8xf32>, vector<8x8xf32> -> vector<8x8xf32>
    %25 = arith.index_cast %c2_i32 : i32 to index
    %c0_18 = arith.constant 0 : index
    %c0_19 = arith.constant 0 : index
    %26 = vector.load %arg4[%25, %c0_18, %c0_19] : memref<4x8x8xf32, #tpu.memory_space<vmem>>, vector<1x8x8xf32>
    %27 = vector.shape_cast %26 : vector<1x8x8xf32> to vector<8x8xf32>
    %28 = vector.shape_cast %24 : vector<8x8xf32> to vector<1x8x8xf32>
    tpu.vector_store %arg4[%25, %c0_18, %c0_19], %28 {strides = array<i32>} : memref<4x8x8xf32, #tpu.memory_space<vmem>>, vector<1x8x8xf32>,
    %c3_i32 = arith.constant 3 : i32
    %29 = arith.index_cast %c3_i32 : i32 to index
    %c0_20 = arith.constant 0 : index
    %c0_21 = arith.constant 0 : index
    %30 = vector.load %arg1[%29, %c0_20, %c0_21] : memref<4x16x16xf32, #tpu.memory_space<vmem>>, vector<1x16x16xf32>
    %31 = vector.shape_cast %30 : vector<1x16x16xf32> to vector<16x16xf32>
    %cst_22 = arith.constant dense<0.000000e+00> : vector<16x8xf32>
    %32 = tpu.matmul %31, %0, %cst_22 {dimension_numbers = #tpu.dot_dimension_numbers<[1], [0], [0], [1], [0, 0, 1, 1], [], []>} : vector<16x16xf32>, vector<16x8xf32>, vector<16x8xf32> -> vector<16x8xf32>
    %cst_23 = arith.constant dense<0.000000e+00> : vector<8x8xf32>
    %33 = tpu.matmul %1, %32, %cst_23 {dimension_numbers = #tpu.dot_dimension_numbers<[1], [0], [0], [1], [0, 0, 1, 1], [], []>} : vector<8x16xf32>, vector<16x8xf32>, vector<8x8xf32> -> vector<8x8xf32>
    %34 = arith.index_cast %c3_i32 : i32 to index
    %c0_24 = arith.constant 0 : index
    %c0_25 = arith.constant 0 : index
    %35 = vector.load %arg4[%34, %c0_24, %c0_25] : memref<4x8x8xf32, #tpu.memory_space<vmem>>, vector<1x8x8xf32>
    %36 = vector.shape_cast %35 : vector<1x8x8xf32> to vector<8x8xf32>
    %37 = vector.shape_cast %33 : vector<8x8xf32> to vector<1x8x8xf32>
    tpu.vector_store %arg4[%34, %c0_24, %c0_25], %37 {strides = array<i32>} : memref<4x8x8xf32, #tpu.memory_space<vmem>>, vector<1x8x8xf32>,
    %c4_i32 = arith.constant 4 : i32
    return
  }
  func.func @transform_0(%arg0: i32) -> (i32, i32, i32) {
    %c0_i32 = arith.constant 0 : i32
    %c0_i32_0 = arith.constant 0 : i32
    %c0_i32_1 = arith.constant 0 : i32
    return %arg0, %c0_i32, %c0_i32_0 : i32, i32, i32
  }
  func.func @transform_1(%arg0: i32) -> (i32, i32) {
    %c0_i32 = arith.constant 0 : i32
    %c0_i32_0 = arith.constant 0 : i32
    %c0_i32_1 = arith.constant 0 : i32
    return %c0_i32, %c0_i32_0 : i32, i32
  }
  func.func @transform_2(%arg0: i32) -> (i32, i32) {
    %c0_i32 = arith.constant 0 : i32
    %c0_i32_0 = arith.constant 0 : i32
    %c0_i32_1 = arith.constant 0 : i32
    return %c0_i32, %c0_i32_0 : i32, i32
  }
  func.func @transform_3(%arg0: i32) -> (i32, i32, i32) {
    %c0_i32 = arith.constant 0 : i32
    %c0_i32_0 = arith.constant 0 : i32
    %c0_i32_1 = arith.constant 0 : i32
    return %arg0, %c0_i32, %c0_i32_0 : i32, i32, i32
  }
}

</mosaic_0001>

<llo_original>
// kernel: _adaptive_avg_pool_pallas.1
$region0: #{_adaptive_avg_pool_pallas.1}
  #allocation0 [shape = 'u32[]', space=smem, size = 0x4, offset = 0x4, fixed_abs, tag = 'smem constant byte address 0x4 - core index']
  #allocation1 [shape = 'u32[72,128]{1,0:T(1,128)}', space=vmem, size = 0x9000, scoped, tag = 'internal scratch']
  %s0 = inlined_call_operand.hbm [shape: f32[8,16,16], index: 0, kind: input, shape index: {}]
  %s1 = inlined_call_operand.hbm [shape: f32[16,8], index: 1, kind: input, shape index: {}]
  %s2 = inlined_call_operand.hbm [shape: f32[8,16], index: 2, kind: input, shape index: {}]
  %s3 = inlined_call_operand.hbm [shape: f32[8,8,8], index: 3, kind: output, shape index: {}]
  %s4 = sld [smem:[#allocation0]]
  $region57: #{_adaptive_avg_pool_pallas.1} parent=0
    _
  %s6 = ssub.s32 1, %s4
  %s7 = scalar_select 0, %s6, %s4
  $region1: #{_adaptive_avg_pool_pallas.1} parent=0
    #allocation2 [shape = 'u8[65536]{0}', space=vmem, size = 0x10000, scoped, tag = 'input window, operand 0']
    #allocation3 [shape = 's32[2]{0}', space=sflag, size = 0x8, scoped, tag = 'scoped memory for _adaptive_avg_pool_pallas.1']
    #allocation4 [shape = 's32[2]{0}', space=sflag, size = 0x8, scoped, tag = 'scoped memory for _adaptive_avg_pool_pallas.1']
    #allocation5 [shape = 'u8[8192]{0}', space=vmem, size = 0x2000, scoped, tag = 'input window, operand 1, single buffered']
    #allocation6 [shape = 's32[1]{0}', space=sflag, size = 0x4, scoped, tag = 'scoped memory for _adaptive_avg_pool_pallas.1']
    #allocation7 [shape = 'u8[4096]{0}', space=vmem, size = 0x1000, scoped, tag = 'input window, operand 2, single buffered']
    #allocation8 [shape = 'u8[32768]{0}', space=vmem, size = 0x8000, scoped, tag = 'output window, operand 0']
    %8 = vsyncpa [#allocation3], 0
    %s9 = scalar_lea.sflag [#allocation3], 1
    %10 = vsyncpa %s9, 0
    %11 = vsyncpa [#allocation6], 0
    %12 = vsyncpa [#allocation4], 0
    %s13 = scalar_lea.sflag [#allocation4], 1
    %14 = vsyncpa %s13, 0
    loop: start=0, step=1, limit=4
    $region2: #{_adaptive_avg_pool_pallas.1} parent=1 // loop_pre_header
      _
    $region3: #{_adaptive_avg_pool_pallas.1} parent=1 // loop_header
      %s16 = sphi 0, %s20
      %p17 = scmp.ge.s32.totalorder %s16, 4
      %s26 = sphi 0, %s28
      %s29 = sphi 0, %s26
      %s30 = sphi 0, %s29
      %s46 = sphi 0, %s30
      %s50 = sphi 0, %s50
      %s52 = sphi 0, %s50
      %s53 = sphi 0, %s52
      %s67 = sphi 0, %s53
      %s71 = sphi 0, %s71
      %s73 = sphi 0, %s71
      %s74 = sphi 0, %s73
      %s88 = sphi 0, %s74
      %s94 = sphi 0, %s96
      %s97 = sphi 0, %s94
      %s98 = sphi 0, %s97
      %s114 = sphi 0, %s98
    $region4: #{_adaptive_avg_pool_pallas.1} parent=1 // loop_header_branch
      %19 = sbr.rel (%p17) target = $region8
    $region5: #{_adaptive_avg_pool_pallas.1} parent=1 // loop_body
      %s21 = ssub.s32 %s16, 1
      %s22 = ssub.s32 %s16, 2
      %s23 = sadd.s32 %s16, 1
      %s24 = ssub.s32 %s16, %s23
      %p25 = scmp.eq.s32.totalorder %s24, 0
      %s27 = sadd.s32 %s26, 1
      %s28 = scalar_select %p25, %s26, %s27
      %p31 = pneg %p25
      %p32 = scmp.eq.s32.totalorder %s16, 1
      %p33 = por %p31, %p32
      %p34 = scmp.ne.s32.totalorder %s26, %s29
      %p35 = scmp.eq.s32.totalorder %s16, 0
      %p36 = por %p34, %p35
      %p37 = scmp.ne.s32.totalorder %s26, %s29
      %p38 = scmp.eq.s32.totalorder %s21, 1
      %p39 = por %p37, %p38
      %p40 = scmp.ne.s32.totalorder %s29, %s30
      %p41 = scmp.eq.s32.totalorder %s21, 0
      %p42 = por %p40, %p41
      %p43 = scmp.ne.s32.totalorder %s29, %s30
      %p44 = scmp.eq.s32.totalorder %s22, 1
      %p45 = por %p43, %p44
      %p47 = scmp.ne.s32.totalorder %s30, %s46
      %p48 = scmp.eq.s32.totalorder %s22, 0
      %p49 = por %p47, %p48
      %s51 = sadd.s32 %s50, 1
      %p54 = scmp.eq.s32.totalorder %s16, 1
      %p55 = scmp.ne.s32.totalorder %s50, %s52
      %p56 = scmp.eq.s32.totalorder %s16, 0
      %p57 = por %p55, %p56
      %p58 = scmp.ne.s32.totalorder %s50, %s52
      %p59 = scmp.eq.s32.totalorder %s21, 1
      %p60 = por %p58, %p59
      %p61 = scmp.ne.s32.totalorder %s52, %s53
      %p62 = scmp.eq.s32.totalorder %s21, 0
      %p63 = por %p61, %p62
      %p64 = scmp.ne.s32.totalorder %s52, %s53
      %p65 = scmp.eq.s32.totalorder %s22, 1
      %p66 = por %p64, %p65
      %p68 = scmp.ne.s32.totalorder %s53, %s67
      %p69 = scmp.eq.s32.totalorder %s22, 0
      %p70 = por %p68, %p69
      %s72 = sadd.s32 %s71, 1
      %p75 = scmp.eq.s32.totalorder %s16, 1
      %p76 = scmp.ne.s32.totalorder %s71, %s73
      %p77 = scmp.eq.s32.totalorder %s16, 0
      %p78 = por %p76, %p77
      %p79 = scmp.ne.s32.totalorder %s71, %s73
      %p80 = scmp.eq.s32.totalorder %s21, 1
      %p81 = por %p79, %p80
      %p82 = scmp.ne.s32.totalorder %s73, %s74
      %p83 = scmp.eq.s32.totalorder %s21, 0
      %p84 = por %p82, %p83
      %p85 = scmp.ne.s32.totalorder %s73, %s74
      %p86 = scmp.eq.s32.totalorder %s22, 1
      %p87 = por %p85, %p86
      %p89 = scmp.ne.s32.totalorder %s74, %s88
      %p90 = scmp.eq.s32.totalorder %s22, 0
      %p91 = por %p89, %p90
      %s92 = ssub.s32 %s16, %s23
      %p93 = scmp.eq.s32.totalorder %s92, 0
      %s95 = sadd.s32 %s94, 1
      %s96 = scalar_select %p93, %s94, %s95
      %p99 = pneg %p93
      %p100 = scmp.eq.s32.totalorder %s16, 1
      %p101 = por %p99, %p100
      %p102 = scmp.ne.s32.totalorder %s94, %s97
      %p103 = scmp.eq.s32.totalorder %s16, 0
      %p104 = por %p102, %p103
      %p105 = scmp.ne.s32.totalorder %s94, %s97
      %p106 = scmp.eq.s32.totalorder %s21, 1
      %p107 = por %p105, %p106
      %p108 = scmp.ne.s32.totalorder %s97, %s98
      %p109 = scmp.eq.s32.totalorder %s21, 0
      %p110 = por %p108, %p109
      %p111 = scmp.ne.s32.totalorder %s97, %s98
      %p112 = scmp.eq.s32.totalorder %s22, 1
      %p113 = por %p111, %p112
      %p115 = scmp.ne.s32.totalorder %s98, %s114
      %p116 = scmp.eq.s32.totalorder %s22, 0
      %p117 = por %p115, %p116
      %p118 = scmp.le.s32.totalorder 1, %s16
      %p119 = scmp.lt.s32.totalorder %s16, 3
      %p120 = pnand %p118, %p119
      %p121 = pneg %p120
      // Predicated region
      $region9: #{_adaptive_avg_pool_pallas.1} parent=5 // pred_check
        _
      $region10: #{_adaptive_avg_pool_pallas.1} parent=5 // pred_check_branch
        %123 = sbr.rel (%p120) target = $region12
      $region11: #{_adaptive_avg_pool_pallas.1} parent=5 // pred_region
        %s124 = ssub.s32 %s16, 1
        // Predicated region
        $region13: #{_adaptive_avg_pool_pallas.1} parent=11 // pred_check
          %p125 = pneg %p63
        $region14: #{_adaptive_avg_pool_pallas.1} parent=11 // pred_check_branch
          %127 = sbr.rel (%p125) target = $region16
        $region15: #{_adaptive_avg_pool_pallas.1} parent=11 // pred_region
          %129 = vsyncadd [#allocation6], 0
          %s130 = sshll.u32 %s1, 4
          %s131 = int_to_ptr.hbm [resolvable:$true] %s130
          %s132 = sshll.u32 [#allocation5], 4
          %s133 = int_to_ptr.vmem [resolvable:$true] %s132
          %138 = dma.hbm_to_vmem [thread:$0]  %s131, 256, %s133, [#allocation6], 128, 128, 8
        $region16: #{_adaptive_avg_pool_pallas.1} parent=11 // pred_fallthru
          _
        // Predicated region
        $region17: #{_adaptive_avg_pool_pallas.1} parent=11 // pred_check
          %p139 = pneg %p84
        $region18: #{_adaptive_avg_pool_pallas.1} parent=11 // pred_check_branch
          %141 = sbr.rel (%p139) target = $region20
        $region19: #{_adaptive_avg_pool_pallas.1} parent=11 // pred_region
          %143 = vsyncadd [#allocation6], 0
          %s145 = sshll.u32 %s2, 4
          %s146 = int_to_ptr.hbm [resolvable:$true] %s145
          %s147 = sshll.u32 [#allocation7], 4
          %s148 = int_to_ptr.vmem [resolvable:$true] %s147
          %150 = dma.hbm_to_vmem [thread:$0]  %s146, 128, %s148, [#allocation6]
        $region20: #{_adaptive_avg_pool_pallas.1} parent=11 // pred_fallthru
          _
      $region12: #{_adaptive_avg_pool_pallas.1} parent=5 // pred_fallthru
        _
      %p151 = scmp.lt.s32.totalorder %s16, 2
      // Predicated region
      $region21: #{_adaptive_avg_pool_pallas.1} parent=5 // pred_check
        %p152 = pneg %p151
      $region22: #{_adaptive_avg_pool_pallas.1} parent=5 // pred_check_branch
        %154 = sbr.rel (%p152) target = $region24
      $region23: #{_adaptive_avg_pool_pallas.1} parent=5 // pred_region
        // Predicated region
        $region25: #{_adaptive_avg_pool_pallas.1} parent=23 // pred_check
          %p155 = pneg %p36
        $region26: #{_adaptive_avg_pool_pallas.1} parent=23 // pred_check_branch
          %157 = sbr.rel (%p155) target = $region28
        $region27: #{_adaptive_avg_pool_pallas.1} parent=23 // pred_region
          %s158 = sand.u32 %s26, 1
          %s159 = scalar_lea.sflag [#allocation3], %s158
          %s160 = sand.u32 %s26, 1
          %s161 = smul.addr %s160, 64
          %s162 = scalar_lea.vmem [#allocation2], %s161
          %s163 = smul.u32 4, %s16
          %165 = vsyncadd %s159, 0
          %s166 = smul.addr %s163, 2
          %s167 = smul.addr %s166, 8
          %s168 = scalar_lea.hbm %s0, %s167
          %s169 = sshll.u32 %s168, 4
          %s170 = int_to_ptr.hbm [resolvable:$true] %s169
          %s171 = sshll.u32 %s162, 4
          %s172 = int_to_ptr.vmem [resolvable:$true] %s171
          %177 = dma.hbm_to_vmem [thread:$0]  %s170, 1024, %s172, %s159, 128, 128, 8
        $region28: #{_adaptive_avg_pool_pallas.1} parent=23 // pred_fallthru
          _
      $region24: #{_adaptive_avg_pool_pallas.1} parent=5 // pred_fallthru
        _
      %p178 = scmp.le.s32.totalorder 1, %s16
      %p179 = scmp.lt.s32.totalorder %s16, 3
      %p180 = pnand %p178, %p179
      %p181 = pneg %p180
      // Predicated region
      $region29: #{_adaptive_avg_pool_pallas.1} parent=5 // pred_check
        _
      $region30: #{_adaptive_avg_pool_pallas.1} parent=5 // pred_check_branch
        %183 = sbr.rel (%p180) target = $region32
      $region31: #{_adaptive_avg_pool_pallas.1} parent=5 // pred_region
        %s184 = ssub.s32 %s16, 1
        %s185 = sand.u32 %s29, 1
        %s186 = scalar_lea.sflag [#allocation3], %s185
        %s187 = sand.u32 %s29, 1
        %s188 = smul.addr %s187, 64
        %s189 = scalar_lea.vmem [#allocation2], %s188
        // Predicated region
        $region33: #{_adaptive_avg_pool_pallas.1} parent=31 // pred_check
          %p190 = pneg %p42
        $region34: #{_adaptive_avg_pool_pallas.1} parent=31 // pred_check_branch
          %192 = sbr.rel (%p190) target = $region36
        $region35: #{_adaptive_avg_pool_pallas.1} parent=31 // pred_region
          %194 = dma.done %s186, 1024
        $region36: #{_adaptive_avg_pool_pallas.1} parent=31 // pred_fallthru
          _
        // Predicated region
        $region37: #{_adaptive_avg_pool_pallas.1} parent=31 // pred_check
          %p195 = pneg %p63
        $region38: #{_adaptive_avg_pool_pallas.1} parent=31 // pred_check_branch
          %197 = sbr.rel (%p195) target = $region40
        $region39: #{_adaptive_avg_pool_pallas.1} parent=31 // pred_region
          %199 = dma.done [#allocation6], 256
        $region40: #{_adaptive_avg_pool_pallas.1} parent=31 // pred_fallthru
          _
        // Predicated region
        $region41: #{_adaptive_avg_pool_pallas.1} parent=31 // pred_check
          %p200 = pneg %p84
        $region42: #{_adaptive_avg_pool_pallas.1} parent=31 // pred_check_branch
          %202 = sbr.rel (%p200) target = $region44
        $region43: #{_adaptive_avg_pool_pallas.1} parent=31 // pred_region
          %204 = dma.done [#allocation6], 128
        $region44: #{_adaptive_avg_pool_pallas.1} parent=31 // pred_fallthru
          _
        %s205 = sand.u32 %s29, 1
        %s206 = scalar_lea.sflag [#allocation3], %s205
        %s207 = sand.u32 %s29, 1
        %s208 = smul.addr %s207, 64
        %s209 = scalar_lea.vmem [#allocation2], %s208
        %p210 = pneg %p42
        %p211 = pneg %p39
        %p212 = pneg %p63
        %p213 = pneg %p60
        %p214 = pneg %p84
        %p215 = pneg %p81
        %p216 = pneg %p110
        %p217 = pneg %p107
        %s218 = sand.u32 %s97, 1
        %s219 = scalar_lea.sflag [#allocation4], %s218
        %s220 = sand.u32 %s97, 1
        %s221 = smul.addr %s220, 32
        %s222 = scalar_lea.vmem [#allocation8], %s221
        %s223 = smul.u32 4, %s21
        %s224 = smul.u32 4, %s21
        %v225 = vld [vmem:[#allocation5] sm:$0xff]
        %v226 = vld [vmem:[#allocation5 + $0x8] sm:$0xff]
        %v227 = vld [vmem:[#allocation7] sm:$0xff]
        %v228 = vld [vmem:[%s189] sm:$0xff]
        %v229 = vld [vmem:[%s189 + $0x8] sm:$0xff]
        %vm230 = vcmask 130048
        %v232 = vsel %vm230, %v228, 0
        %v235 = vsel %vm230, %v229, 0
        %237 = vmatpush.msra.mxu0 0.0
        %238 = vmatpush.msra.mxu0 0.0
        %239 = vmatpush.msra.mxu0 0.0
        %240 = vmatpush.msra.mxu0 0.0
        %241 = vmatpush.msra.mxu0 0.0
        %242 = vmatpush.msra.mxu0 0.0
        %243 = vmatpush.msra.mxu0 0.0
        %244 = vmatpush.msra.mxu0 0.0
        %245 = vmatpush.msra.mxu0 0.0
        %246 = vmatpush.msra.mxu0 0.0
        %247 = vmatpush.msra.mxu0 0.0
        %248 = vmatpush.msra.mxu0 0.0
        %249 = vmatpush.msra.mxu0 0.0
        %250 = vmatpush.msra.mxu0 0.0
        %251 = vmatpush.msra.mxu0 %v226
        %252 = vmatpush.msra.mxu0 %v225
        %253 = vmatmul.f32.gmra.mxu0 %v232
        %v254 = vpop.f32.mrf.mxu0
        %v255 = vadd.f32 0.0, %v254
        %256 = vmatmul.f32.gmra.mxu0 %v235
        %v257 = vpop.f32.mrf.mxu0
        %v258 = vadd.f32 0.0, %v257
        %259 = vdwg.mxu0
        %v261 = vsel %vm230, %v227, 0
        %263 = vmatpush.msra.mxu0 0.0
        %264 = vmatpush.msra.mxu0 0.0
        %265 = vmatpush.msra.mxu0 0.0
        %266 = vmatpush.msra.mxu0 0.0
        %267 = vmatpush.msra.mxu0 0.0
        %268 = vmatpush.msra.mxu0 0.0
        %269 = vmatpush.msra.mxu0 0.0
        %270 = vmatpush.msra.mxu0 0.0
        %271 = vmatpush.msra.mxu0 0.0
        %272 = vmatpush.msra.mxu0 0.0
        %273 = vmatpush.msra.mxu0 0.0
        %274 = vmatpush.msra.mxu0 0.0
        %275 = vmatpush.msra.mxu0 0.0
        %276 = vmatpush.msra.mxu0 0.0
        %277 = vmatpush.msra.mxu0 %v258
        %278 = vmatpush.msra.mxu0 %v255
        %279 = vmatmul.f32.gmra.mxu0 %v261
        %v280 = vpop.f32.mrf.mxu0
        %v281 = vadd.f32 0.0, %v280
        %282 = vdwg.mxu0
        %vm283 = vcmask 64512
        %284 = vst.msk [vmem:[%s222] sm:$0xff] %vm283, %v281
        %s285 = scalar_lea.vmem %s189, 16 [#allocation2]
        %v286 = vld [vmem:[%s285] sm:$0xff]
        %v287 = vld [vmem:[%s285 + $0x8] sm:$0xff]
        %v289 = vsel %vm230, %v286, 0
        %v292 = vsel %vm230, %v287, 0
        %294 = vmatpush.msra.mxu0 0.0
        %295 = vmatpush.msra.mxu0 0.0
        %296 = vmatpush.msra.mxu0 0.0
        %297 = vmatpush.msra.mxu0 0.0
        %298 = vmatpush.msra.mxu0 0.0
        %299 = vmatpush.msra.mxu0 0.0
        %300 = vmatpush.msra.mxu0 0.0
        %301 = vmatpush.msra.mxu0 0.0
        %302 = vmatpush.msra.mxu0 0.0
        %303 = vmatpush.msra.mxu0 0.0
        %304 = vmatpush.msra.mxu0 0.0
        %305 = vmatpush.msra.mxu0 0.0
        %306 = vmatpush.msra.mxu0 0.0
        %307 = vmatpush.msra.mxu0 0.0
        %308 = vmatpush.msra.mxu0 %v226
        %309 = vmatpush.msra.mxu0 %v225
        %310 = vmatmul.f32.gmra.mxu0 %v289
        %v311 = vpop.f32.mrf.mxu0
        %v312 = vadd.f32 0.0, %v311
        %313 = vmatmul.f32.gmra.mxu0 %v292
        %v314 = vpop.f32.mrf.mxu0
        %v315 = vadd.f32 0.0, %v314
        %316 = vdwg.mxu0
        %317 = vmatpush.msra.mxu0 0.0
        %318 = vmatpush.msra.mxu0 0.0
        %319 = vmatpush.msra.mxu0 0.0
        %320 = vmatpush.msra.mxu0 0.0
        %321 = vmatpush.msra.mxu0 0.0
        %322 = vmatpush.msra.mxu0 0.0
        %323 = vmatpush.msra.mxu0 0.0
        %324 = vmatpush.msra.mxu0 0.0
        %325 = vmatpush.msra.mxu0 0.0
        %326 = vmatpush.msra.mxu0 0.0
        %327 = vmatpush.msra.mxu0 0.0
        %328 = vmatpush.msra.mxu0 0.0
        %329 = vmatpush.msra.mxu0 0.0
        %330 = vmatpush.msra.mxu0 0.0
        %331 = vmatpush.msra.mxu0 %v315
        %332 = vmatpush.msra.mxu0 %v312
        %333 = vmatmul.f32.gmra.mxu0 %v261
        %v334 = vpop.f32.mrf.mxu0
        %v335 = vadd.f32 0.0, %v334
        %336 = vdwg.mxu0
        %s337 = scalar_lea.vmem %s222, 8 [#allocation8]
        %338 = vst.msk [vmem:[%s337] sm:$0xff] %vm283, %v335
        %s339 = scalar_lea.vmem %s189, 32 [#allocation2]
        %v340 = vld [vmem:[%s339] sm:$0xff]
        %v341 = vld [vmem:[%s339 + $0x8] sm:$0xff]
        %v343 = vsel %vm230, %v340, 0
        %v346 = vsel %vm230, %v341, 0
        %348 = vmatpush.msra.mxu0 0.0
        %349 = vmatpush.msra.mxu0 0.0
        %350 = vmatpush.msra.mxu0 0.0
        %351 = vmatpush.msra.mxu0 0.0
        %352 = vmatpush.msra.mxu0 0.0
        %353 = vmatpush.msra.mxu0 0.0
        %354 = vmatpush.msra.mxu0 0.0
        %355 = vmatpush.msra.mxu0 0.0
        %356 = vmatpush.msra.mxu0 0.0
        %357 = vmatpush.msra.mxu0 0.0
        %358 = vmatpush.msra.mxu0 0.0
        %359 = vmatpush.msra.mxu0 0.0
        %360 = vmatpush.msra.mxu0 0.0
        %361 = vmatpush.msra.mxu0 0.0
        %362 = vmatpush.msra.mxu0 %v226
        %363 = vmatpush.msra.mxu0 %v225
        %364 = vmatmul.f32.gmra.mxu0 %v343
        %v365 = vpop.f32.mrf.mxu0
        %v366 = vadd.f32 0.0, %v365
        %367 = vmatmul.f32.gmra.mxu0 %v346
        %v368 = vpop.f32.mrf.mxu0
        %v369 = vadd.f32 0.0, %v368
        %370 = vdwg.mxu0
        %371 = vmatpush.msra.mxu0 0.0
        %372 = vmatpush.msra.mxu0 0.0
        %373 = vmatpush.msra.mxu0 0.0
        %374 = vmatpush.msra.mxu0 0.0
        %375 = vmatpush.msra.mxu0 0.0
        %376 = vmatpush.msra.mxu0 0.0
        %377 = vmatpush.msra.mxu0 0.0
        %378 = vmatpush.msra.mxu0 0.0
        %379 = vmatpush.msra.mxu0 0.0
        %380 = vmatpush.msra.mxu0 0.0
        %381 = vmatpush.msra.mxu0 0.0
        %382 = vmatpush.msra.mxu0 0.0
        %383 = vmatpush.msra.mxu0 0.0
        %384 = vmatpush.msra.mxu0 0.0
        %385 = vmatpush.msra.mxu0 %v369
        %386 = vmatpush.msra.mxu0 %v366
        %387 = vmatmul.f32.gmra.mxu0 %v261
        %v388 = vpop.f32.mrf.mxu0
        %v389 = vadd.f32 0.0, %v388
        %390 = vdwg.mxu0
        %s391 = scalar_lea.vmem %s222, 16 [#allocation8]
        %392 = vst.msk [vmem:[%s391] sm:$0xff] %vm283, %v389
        %s393 = scalar_lea.vmem %s189, 48 [#allocation2]
        %v394 = vld [vmem:[%s393] sm:$0xff]
        %v395 = vld [vmem:[%s393 + $0x8] sm:$0xff]
        %v397 = vsel %vm230, %v394, 0
        %v400 = vsel %vm230, %v395, 0
        %402 = vmatpush.msra.mxu0 0.0
        %403 = vmatpush.msra.mxu0 0.0
        %404 = vmatpush.msra.mxu0 0.0
        %405 = vmatpush.msra.mxu0 0.0
        %406 = vmatpush.msra.mxu0 0.0
        %407 = vmatpush.msra.mxu0 0.0
        %408 = vmatpush.msra.mxu0 0.0
        %409 = vmatpush.msra.mxu0 0.0
        %410 = vmatpush.msra.mxu0 0.0
        %411 = vmatpush.msra.mxu0 0.0
        %412 = vmatpush.msra.mxu0 0.0
        %413 = vmatpush.msra.mxu0 0.0
        %414 = vmatpush.msra.mxu0 0.0
        %415 = vmatpush.msra.mxu0 0.0
        %416 = vmatpush.msra.mxu0 %v226
        %417 = vmatpush.msra.mxu0 %v225
        %418 = vmatmul.f32.gmra.mxu0 %v397
        %v419 = vpop.f32.mrf.mxu0
        %v420 = vadd.f32 0.0, %v419
        %421 = vmatmul.f32.gmra.mxu0 %v400
        %v422 = vpop.f32.mrf.mxu0
        %v423 = vadd.f32 0.0, %v422
        %424 = vdwg.mxu0
        %425 = vmatpush.msra.mxu0 0.0
        %426 = vmatpush.msra.mxu0 0.0
        %427 = vmatpush.msra.mxu0 0.0
        %428 = vmatpush.msra.mxu0 0.0
        %429 = vmatpush.msra.mxu0 0.0
        %430 = vmatpush.msra.mxu0 0.0
        %431 = vmatpush.msra.mxu0 0.0
        %432 = vmatpush.msra.mxu0 0.0
        %433 = vmatpush.msra.mxu0 0.0
        %434 = vmatpush.msra.mxu0 0.0
        %435 = vmatpush.msra.mxu0 0.0
        %436 = vmatpush.msra.mxu0 0.0
        %437 = vmatpush.msra.mxu0 0.0
        %438 = vmatpush.msra.mxu0 0.0
        %439 = vmatpush.msra.mxu0 %v423
        %440 = vmatpush.msra.mxu0 %v420
        %441 = vmatmul.f32.gmra.mxu0 %v261
        %v442 = vpop.f32.mrf.mxu0
        %v443 = vadd.f32 0.0, %v442
        %444 = vdwg.mxu0
        %s445 = scalar_lea.vmem %s222, 24 [#allocation8]
        %446 = vst.msk [vmem:[%s445] sm:$0xff] %vm283, %v443
        %s447 = sand.u32 %s97, 1
        %s448 = scalar_lea.sflag [#allocation4], %s447
        %s449 = sand.u32 %s97, 1
        %s450 = smul.addr %s449, 32
        %s451 = scalar_lea.vmem [#allocation8], %s450
        // Predicated region
        $region45: #{_adaptive_avg_pool_pallas.1} parent=31 // pred_check
          %p452 = pneg %p107
        $region46: #{_adaptive_avg_pool_pallas.1} parent=31 // pred_check_branch
          %454 = sbr.rel (%p452) target = $region48
        $region47: #{_adaptive_avg_pool_pallas.1} parent=31 // pred_region
          %s455 = smul.u32 4, %s21
          %457 = vsyncadd %s448, 0
          %s458 = smul.addr %s455, 8
          %s459 = scalar_lea.hbm %s3, %s458
          %s460 = sshll.u32 %s451, 4
          %s461 = int_to_ptr.vmem [resolvable:$true] %s460
          %s462 = sshll.u32 %s459, 4
          %s463 = int_to_ptr.hbm [resolvable:$true] %s462
          %468 = dma.vmem_to_hbm [thread:$0]  %s461, 512, %s463, %s448, 128, 128, 8
        $region48: #{_adaptive_avg_pool_pallas.1} parent=31 // pred_fallthru
          _
      $region32: #{_adaptive_avg_pool_pallas.1} parent=5 // pred_fallthru
        _
      %p469 = scmp.le.s32.totalorder 2, %s16
      // Predicated region
      $region49: #{_adaptive_avg_pool_pallas.1} parent=5 // pred_check
        %p470 = pneg %p469
      $region50: #{_adaptive_avg_pool_pallas.1} parent=5 // pred_check_branch
        %472 = sbr.rel (%p470) target = $region52
      $region51: #{_adaptive_avg_pool_pallas.1} parent=5 // pred_region
        %s473 = ssub.s32 %s16, 2
        // Predicated region
        $region53: #{_adaptive_avg_pool_pallas.1} parent=51 // pred_check
          %p474 = pneg %p113
        $region54: #{_adaptive_avg_pool_pallas.1} parent=51 // pred_check_branch
          %476 = sbr.rel (%p474) target = $region56
        $region55: #{_adaptive_avg_pool_pallas.1} parent=51 // pred_region
          %s477 = sand.u32 %s98, 1
          %s478 = scalar_lea.sflag [#allocation4], %s477
          %s479 = sand.u32 %s98, 1
          %s480 = smul.addr %s479, 32
          %s481 = scalar_lea.vmem [#allocation8], %s480
          %483 = dma.done %s478, 512
        $region56: #{_adaptive_avg_pool_pallas.1} parent=51 // pred_fallthru
          _
      $region52: #{_adaptive_avg_pool_pallas.1} parent=5 // pred_fallthru
        _
    $region6: #{_adaptive_avg_pool_pallas.1} parent=1 // loop_footer
      %s20 = sadd.s32 1, %s16
    $region7: #{_adaptive_avg_pool_pallas.1} parent=1 // loop_footer_branch
      %15 = sbr.rel target = $region3
    $region8: #{_adaptive_avg_pool_pallas.1} parent=1 // loop_exit
      _
    %484 = vsyncpa [#allocation3], 1
    %s485 = scalar_lea.sflag [#allocation3], 1
    %486 = vsyncpa %s485, 1
    %487 = vsyncpa [#allocation6], 1
    %488 = vsyncpa [#allocation4], 1
    %s489 = scalar_lea.sflag [#allocation4], 1
    %490 = vsyncpa %s489, 1

</llo_original>
